<compile_context>
chip_gen: v7x
topology: tpu7x:2x2x1
jax: 0.10.0
libtpu: 0.0.40
codegen_flags: <defaults>
</compile_context>

<pallas_src>
import math
from typing import NamedTuple

import jax
import jax.numpy as jnp
from jax.experimental import pallas as pl
from jax.experimental.pallas import tpu as pltpu

LANE = 128
_DEFAULT_VMEM_BUDGET = 32 << 20  # conservative even for v7x's 64 MiB/TC


def _round_up(x, m):
    return ((x + m - 1) // m) * m


def _sublane_align(dtype):
    # 8 rows for 4-byte dtypes, 16 for bf16/fp16, 32 for int8/fp8.
    return max(8, 32 // jnp.dtype(dtype).itemsize)


def _pick_divisor_tile(dim_pad, target, unit=LANE):
    """Largest multiple-of-`unit` divisor of dim_pad that is <= target."""
    if dim_pad <= target:
        return dim_pad
    best = unit
    for cand in range(unit, target + 1, unit):
        if dim_pad % cand == 0:
            best = cand
    return best


def _pick_k_tile(k_pad, tm, tn, x_isz, w_isz, o_isz, budget):
    """Largest multiple-of-128 divisor of k_pad whose double-buffered working
    set (x tile, w tile, out tile, f32 accumulator) fits `budget` bytes."""
    best = LANE
    for cand in range(LANE, k_pad + 1, LANE):
        if k_pad % cand != 0:
            continue
        ws = (2 * tm * cand * x_isz      # x double buffer
              + 2 * cand * tn * w_isz    # w double buffer
              + 2 * tm * tn * o_isz      # out double buffer
              + tm * tn * 4)             # f32 accumulator
        if ws <= budget:
            best = cand
    return best


# ----------------------------- kernels --------------------------------------
def _linear_kernel_fullk(x_ref, w_ref, b_ref, o_ref):
    """Whole contraction in one MXU pass; bias added once in f32."""
    acc = jnp.dot(x_ref[...], w_ref[...], preferred_element_type=jnp.float32)
    o_ref[...] = (acc + b_ref[...]).astype(o_ref.dtype)


def _linear_kernel_splitk(x_ref, w_ref, b_ref, o_ref, acc_ref):
    """One (i, j, k) grid step with an f32 VMEM accumulator."""
    k = pl.program_id(2)

    @pl.when(k == 0)
    def _():
        # Fold the bias into the accumulator init -> finalize is a pure store.
        acc_ref[...] = jnp.broadcast_to(b_ref[...], acc_ref.shape)

    acc_ref[...] += jnp.dot(x_ref[...], w_ref[...],
                            preferred_element_type=jnp.float32)

    @pl.when(k == pl.num_programs(2) - 1)
    def _():
        o_ref[...] = acc_ref[...].astype(o_ref.dtype)


# ----------------------------- params ---------------------------------------
class ClassifierParams(NamedTuple):
    weight_t: jax.Array   # [K_pad, N_pad] pre-transposed, zero-padded at init
    bias: jax.Array       # [1, N_pad]     f32, zero-padded at init
    in_features: int      # E (logical)
    out_features: int     # N (logical)


def init_classifier_params(key, mm_embed_size, num_activity_types,
                           dtype=jnp.float32):
    """Xavier-uniform weight stored pre-transposed AND pre-padded so the hot
    path touches the weight exactly once per forward call."""
    E, N = mm_embed_size, num_activity_types
    bound = math.sqrt(6.0 / (E + N))
    w = jax.random.uniform(key, (E, N), minval=-bound, maxval=bound,
                           dtype=jnp.float32).astype(dtype)
    k_pad, n_pad = _round_up(E, LANE), _round_up(N, LANE)
    # Zero padding along K is load-bearing: padded rows must contribute 0.
    w_pad = jnp.pad(w, ((0, k_pad - E), (0, n_pad - N)))
    b_pad = jnp.zeros((1, n_pad), dtype=jnp.float32)
    return ClassifierParams(w_pad, b_pad, E, N)


# ----------------------------- forward --------------------------------------
def classifier_forward(mm_embed, params: ClassifierParams,
                       vmem_budget_bytes=_DEFAULT_VMEM_BUDGET):
    """y = mm_embed @ W^T + b (PyTorch nn.Linear semantics)."""
    # TODO(synk): for truly tiny heads the pallas_call launch overhead
    # dominates; in a real model this head should be fused into the producer
    # kernel of mm_embed rather than run standalone.
    orig_shape = mm_embed.shape
    E, N = params.in_features, params.out_features
    x = mm_embed.reshape(-1, orig_shape[-1])
    B = x.shape[0]
    assert x.shape[1] == E, "embed dim mismatch"

    K_pad, N_pad = params.weight_t.shape
    out_dtype = mm_embed.dtype
    # Run the MXU at the weight's (possibly bf16) precision; acc stays f32.
    if x.dtype != params.weight_t.dtype:
        x = x.astype(params.weight_t.dtype)

    x_isz = jnp.dtype(x.dtype).itemsize
    w_isz = jnp.dtype(params.weight_t.dtype).itemsize
    o_isz = jnp.dtype(out_dtype).itemsize

    # ---- tile selection -----------------------------------------------------
    align_m = _sublane_align(x.dtype)
    tm = _round_up(B, align_m)
    if tm > 512:
        tm = 512                       # 512 is a multiple of 8 / 16 / 32
    M_pad = _round_up(B, tm)
    tn = _pick_divisor_tile(N_pad, 512)

    # Guarantee >= 2 parallel (i, j) tiles so both v7x TensorCores get work.
    if (M_pad // tm) * (N_pad // tn) == 1:
        if N_pad >= 2 * LANE:
            tn = LANE
        elif tm > align_m:
            tm_half = _round_up((tm + 1) // 2, align_m)
            if _round_up(B, tm_half) // tm_half >= 2:
                tm = tm_half
                M_pad = _round_up(B, tm)

    tk = _pick_k_tile(K_pad, tm, tn, x_isz, w_isz, o_isz, vmem_budget_bytes)

    # ---- pad activations only (weight/bias were padded once at init) -------
    x_p = x
    if (M_pad, K_pad) != (B, E):
        x_p = jnp.pad(x, ((0, M_pad - B), (0, K_pad - E)))

    grid_ij = (M_pad // tm, N_pad // tn)

    if tk == K_pad:
        # Weight tile is VMEM-resident across the whole contraction: single
        # streamed matmul per output tile, no accumulator machinery at all.
        out_padded = pl.pallas_call(
            _linear_kernel_fullk,
            out_shape=jax.ShapeDtypeStruct((M_pad, N_pad), out_dtype),
            grid_spec=pltpu.PrefetchScalarGridSpec(
                num_scalar_prefetch=0,
                grid=grid_ij,
                in_specs=[
                    pl.BlockSpec((tm, K_pad), lambda i, j: (i, 0)),  # x
                    pl.BlockSpec((K_pad, tn), lambda i, j: (0, j)),  # w
                    pl.BlockSpec((1, tn), lambda i, j: (0, j)),      # bias
                ],
                out_specs=pl.BlockSpec((tm, tn), lambda i, j: (i, j)),
            ),
            compiler_params=pltpu.CompilerParams(
                dimension_semantics=("parallel", "parallel")),
        )(x_p, params.weight_t, params.bias)
    else:
        grid = grid_ij + (K_pad // tk,)
        out_padded = pl.pallas_call(
            _linear_kernel_splitk,
            out_shape=jax.ShapeDtypeStruct((M_pad, N_pad), out_dtype),
            grid_spec=pltpu.PrefetchScalarGridSpec(
                num_scalar_prefetch=0,
                grid=grid,
                in_specs=[
                    pl.BlockSpec((tm, tk), lambda i, j, k: (i, k)),   # x
                    pl.BlockSpec((tk, tn), lambda i, j, k: (k, j)),   # w
                    pl.BlockSpec((1, tn), lambda i, j, k: (0, j)),    # bias
                ],
                out_specs=pl.BlockSpec((tm, tn), lambda i, j, k: (i, j)),
                scratch_shapes=[pltpu.VMEM((tm, tn), jnp.float32)],
            ),
            compiler_params=pltpu.CompilerParams(
                dimension_semantics=("parallel", "parallel", "arbitrary")),
        )(x_p, params.weight_t, params.bias)

    out = out_padded
    if (M_pad, N_pad) != (B, N):
        out = out_padded[:B, :N]
    return out.reshape(orig_shape[:-1] + (N,))


# ----------------------------- demo / checks --------------------------------
if __name__ == "__main__":
    key = jax.random.PRNGKey(0)
    k_w1, k_x1, k_w2, k_x2, k_w3, k_x3 = jax.random.split(key, 6)

    # 1) The module's own tiny shapes (f32): degenerate single-tile full-K path.
    E1, N1, B1 = 32, 8, 8
    p1 = init_classifier_params(k_w1, E1, N1, dtype=jnp.float32)
    x1 = jax.random.normal(k_x1, (B1, E1), dtype=jnp.float32)
    y1 = classifier_forward(x1, p1)
    jax.block_until_ready(y1)
    ref1 = x1 @ p1.weight_t[:E1, :N1] + p1.bias[0, :N1]
    assert y1.shape == (B1, N1)
    assert jnp.allclose(y1, ref1, atol=1e-5, rtol=1e-5)

    # 2) bf16 params + activations: full-K 2-D grid, >= 2 parallel tiles.
    E2, N2, B2 = 256, 160, 256
    p2 = init_classifier_params(k_w2, E2, N2, dtype=jnp.bfloat16)
    x2 = jax.random.normal(k_x2, (B2, E2), dtype=jnp.bfloat16)
    y2 = classifier_forward(x2, p2)
    jax.block_until_ready(y2)
    ref2 = (x2.astype(jnp.float32) @ p2.weight_t[:E2, :N2].astype(jnp.float32)
            + p2.bias[0, :N2])
    assert y2.shape == (B2, N2)
    assert jnp.allclose(y2.astype(jnp.float32), ref2, atol=5e-2, rtol=5e-2)

    # 3) Non-aligned E/N + tiny VMEM budget to exercise the split-K path.
    E3, N3, B3 = 200, 100, 64
    p3 = init_classifier_params(k_w3, E3, N3, dtype=jnp.float32)
    x3 = jax.random.normal(k_x3, (B3, E3), dtype=jnp.float32)
    y3 = classifier_forward(x3, p3, vmem_budget_bytes=256 << 10)
    jax.block_until_ready(y3)
    ref3 = x3 @ p3.weight_t[:E3, :N3] + p3.bias[0, :N3]
    assert y3.shape == (B3, N3)
    assert jnp.allclose(y3, ref3, atol=1e-4, rtol=1e-4)

    print("KERNEL_OK")
</pallas_src>

<mosaic_0001>
module attributes {stable_mosaic.version = 11 : i64} {
  func.func @_linear_kernel_fullk(%arg0: i32, %arg1: i32, %arg2: memref<8x128xf32, #tpu.memory_space<vmem>>, %arg3: memref<128x128xf32, #tpu.memory_space<vmem>>, %arg4: memref<1x128xf32, #tpu.memory_space<vmem>>, %arg5: memref<8x128xf32, #tpu.memory_space<vmem>>) attributes {dimension_semantics = [#tpu.dimension_semantics<parallel>, #tpu.dimension_semantics<parallel>], iteration_bounds = array<i64: 1, 1>, scalar_prefetch = 0 : i64, scratch_operands = 0 : i64, tpu.core_type = #tpu.core_type<tc>, window_params = [{transform_indices = @transform_0, window_bounds = array<i64: 8, 128>}, {transform_indices = @transform_1, window_bounds = array<i64: 128, 128>}, {transform_indices = @transform_2, window_bounds = array<i64: 1, 128>}, {transform_indices = @transform_3, window_bounds = array<i64: 8, 128>}]} {
    %c0 = arith.constant 0 : index
    %c0_0 = arith.constant 0 : index
    %0 = vector.load %arg2[%c0, %c0_0] : memref<8x128xf32, #tpu.memory_space<vmem>>, vector<8x128xf32>
    %c0_1 = arith.constant 0 : index
    %c0_2 = arith.constant 0 : index
    %1 = vector.load %arg3[%c0_1, %c0_2] : memref<128x128xf32, #tpu.memory_space<vmem>>, vector<128x128xf32>
    %cst = arith.constant dense<0.000000e+00> : vector<8x128xf32>
    %2 = tpu.matmul %0, %1, %cst {dimension_numbers = #tpu.dot_dimension_numbers<[1], [0], [0], [1], [0, 0, 1, 1], [], []>} : vector<8x128xf32>, vector<128x128xf32>, vector<8x128xf32> -> vector<8x128xf32>
    %c0_3 = arith.constant 0 : index
    %c0_4 = arith.constant 0 : index
    %3 = vector.load %arg4[%c0_3, %c0_4] : memref<1x128xf32, #tpu.memory_space<vmem>>, vector<1x128xf32>
    %4 = vector.broadcast %3 : vector<1x128xf32> to vector<8x128xf32>
    %5 = arith.addf %2, %4 : vector<8x128xf32>
    %c0_5 = arith.constant 0 : index
    %c0_6 = arith.constant 0 : index
    %6 = vector.load %arg5[%c0_5, %c0_6] : memref<8x128xf32, #tpu.memory_space<vmem>>, vector<8x128xf32>
    tpu.vector_store %arg5[%c0_5, %c0_6], %5 {strides = array<i32>} : memref<8x128xf32, #tpu.memory_space<vmem>>, vector<8x128xf32>,
    return
  }
  func.func @transform_0(%arg0: i32, %arg1: i32) -> (i32, i32) {
    %c0_i32 = arith.constant 0 : i32
    %c0_i32_0 = arith.constant 0 : i32
    return %arg0, %c0_i32 : i32, i32
  }
  func.func @transform_1(%arg0: i32, %arg1: i32) -> (i32, i32) {
    %c0_i32 = arith.constant 0 : i32
    %c0_i32_0 = arith.constant 0 : i32
    return %c0_i32, %arg1 : i32, i32
  }
  func.func @transform_2(%arg0: i32, %arg1: i32) -> (i32, i32) {
    %c0_i32 = arith.constant 0 : i32
    %c0_i32_0 = arith.constant 0 : i32
    return %c0_i32, %arg1 : i32, i32
  }
  func.func @transform_3(%arg0: i32, %arg1: i32) -> (i32, i32) {
    %c0_i32 = arith.constant 0 : i32
    return %arg0, %arg1 : i32, i32
  }
}

</mosaic_0001>

<llo_original>
// kernel: tpu_custom_call.1
$region0: #{tpu_custom_call.1}
  #allocation0 [shape = 'u32[]', space=smem, size = 0x4, offset = 0x4, fixed_abs, tag = 'smem constant byte address 0x4 - core index']
  #allocation1 [shape = 'u32[144,128]{1,0:T(1,128)}', space=vmem, size = 0x12000, scoped, tag = 'internal scratch']
  %s0 = inlined_call_operand.hbm [shape: f32[8,128], index: 0, kind: input, shape index: {}]
  %s1 = inlined_call_operand.hbm [shape: f32[128,128], index: 1, kind: input, shape index: {}]
  %s2 = inlined_call_operand.vmem [shape: f32[1,128], index: 2, kind: input, shape index: {}]
  %s3 = inlined_call_operand.hbm [shape: f32[8,128], index: 3, kind: output, shape index: {}]
  %s4 = sld [smem:[#allocation0]]
  $region30: #{tpu_custom_call.1} parent=0
    _
  %s6 = ssub.s32 1, %s4
  %s7 = scalar_select 0, %s6, %s4
  $region1: #{tpu_custom_call.1} parent=0
    #allocation2 [shape = 'u8[4096]{0}', space=vmem, size = 0x1000, scoped, tag = 'input window, operand 0, single buffered']
    #allocation3 [shape = 's32[1]{0}', space=sflag, size = 0x4, scoped, tag = 'scoped memory for tpu_custom_call.1']
    #allocation4 [shape = 's32[1]{0}', space=sflag, size = 0x4, scoped, tag = 'scoped memory for tpu_custom_call.1']
    #allocation5 [shape = 'u8[65536]{0}', space=vmem, size = 0x10000, scoped, tag = 'input window, operand 1, single buffered']
    #allocation6 [shape = 's32[1]{0}', space=sflag, size = 0x4, scoped, tag = 'scoped memory for tpu_custom_call.1']
    #allocation7 [shape = 'u8[4096]{0}', space=vmem, size = 0x1000, scoped, tag = 'output window, operand 0, single buffered']
    %8 = vsyncpa [#allocation3], 0
    %9 = vsyncpa [#allocation6], 0
    %10 = vsyncpa [#allocation4], 0
    // Predicated region
    $region2: #{tpu_custom_call.1} parent=1 // pred_check
      _
    $region3: #{tpu_custom_call.1} parent=1 // pred_check_branch
      %12 = sbr.rel (0) target = $region5
    $region4: #{tpu_custom_call.1} parent=1 // pred_region
      %s14 = ssub.s32 128, 128
      %15 = vsyncadd [#allocation3], %s14
      %s17 = sshll.u32 [#allocation2], 4
      %s18 = int_to_ptr.vmem [resolvable:$true] %s17
      %20 = dma.hbm_to_vmem [thread:$0]  %s0, 128, %s18, [#allocation3]
    $region5: #{tpu_custom_call.1} parent=1 // pred_fallthru
      _
    // Predicated region
    $region6: #{tpu_custom_call.1} parent=1 // pred_check
      _
    $region7: #{tpu_custom_call.1} parent=1 // pred_check_branch
      %22 = sbr.rel (0) target = $region9
    $region8: #{tpu_custom_call.1} parent=1 // pred_region
      %s24 = ssub.s32 2048, 2048
      %25 = vsyncadd [#allocation6], %s24
      %s26 = sshll.u32 [#allocation5], 4
      %s27 = int_to_ptr.vmem [resolvable:$true] %s26
      %32 = dma.hbm_to_vmem [thread:$0]  %s1, 2048, %s27, [#allocation6], 128, 128, 8
    $region9: #{tpu_custom_call.1} parent=1 // pred_fallthru
      _
    // Predicated region
    $region10: #{tpu_custom_call.1} parent=1 // pred_check
      _
    $region11: #{tpu_custom_call.1} parent=1 // pred_check_branch
      %34 = sbr.rel (0) target = $region13
    $region12: #{tpu_custom_call.1} parent=1 // pred_region
      _
    $region13: #{tpu_custom_call.1} parent=1 // pred_fallthru
      _
    // Predicated region
    $region14: #{tpu_custom_call.1} parent=1 // pred_check
      _
    $region15: #{tpu_custom_call.1} parent=1 // pred_check_branch
      %36 = sbr.rel (0) target = $region17
    $region16: #{tpu_custom_call.1} parent=1 // pred_region
      %37 = dma.done [#allocation3], 128
    $region17: #{tpu_custom_call.1} parent=1 // pred_fallthru
      _
    // Predicated region
    $region18: #{tpu_custom_call.1} parent=1 // pred_check
      _
    $region19: #{tpu_custom_call.1} parent=1 // pred_check_branch
      %39 = sbr.rel (0) target = $region21
    $region20: #{tpu_custom_call.1} parent=1 // pred_region
      %40 = dma.done [#allocation6], 2048
    $region21: #{tpu_custom_call.1} parent=1 // pred_fallthru
      _
    %v41 = vld [vmem:[#allocation2] sm:$0xff]
    %v42 = vld [vmem:[#allocation5] sm:$0xff]
    %v43 = vld [vmem:[#allocation5 + $0x8] sm:$0xff]
    %v44 = vld [vmem:[#allocation5 + $0x10] sm:$0xff]
    %v45 = vld [vmem:[#allocation5 + $0x18] sm:$0xff]
    %v46 = vld [vmem:[#allocation5 + $0x20] sm:$0xff]
    %v47 = vld [vmem:[#allocation5 + $0x28] sm:$0xff]
    %v48 = vld [vmem:[#allocation5 + $0x30] sm:$0xff]
    %v49 = vld [vmem:[#allocation5 + $0x38] sm:$0xff]
    %v50 = vld [vmem:[#allocation5 + $0x40] sm:$0xff]
    %v51 = vld [vmem:[#allocation5 + $0x48] sm:$0xff]
    %v52 = vld [vmem:[#allocation5 + $0x50] sm:$0xff]
    %v53 = vld [vmem:[#allocation5 + $0x58] sm:$0xff]
    %v54 = vld [vmem:[#allocation5 + $0x60] sm:$0xff]
    %v55 = vld [vmem:[#allocation5 + $0x68] sm:$0xff]
    %v56 = vld [vmem:[#allocation5 + $0x70] sm:$0xff]
    %v57 = vld [vmem:[#allocation5 + $0x78] sm:$0xff]
    %v58 = vld [vmem:[%s2] sm:$0x1]
    %v60 = vlaneseq
    %v61 = vshrl.u32 %v60, 7
    %v62 = vsub.s32 0, %v61
    %v63 = vrot.slane %v58, %v62
    %65 = vmatprep.subr.mxu0 0.0
    %66 = vmatpush1.msra.mxu0 %v42
    %67 = vmatprep.subr.mxu0 0.0
    %68 = vmatpush1.msra.mxu0 %v43
    %69 = vmatprep.subr.mxu0 0.0
    %70 = vmatpush1.msra.mxu0 %v44
    %71 = vmatprep.subr.mxu0 0.0
    %72 = vmatpush1.msra.mxu0 %v45
    %73 = vmatprep.subr.mxu0 0.0
    %74 = vmatpush1.msra.mxu0 %v46
    %75 = vmatprep.subr.mxu0 0.0
    %76 = vmatpush1.msra.mxu0 %v47
    %77 = vmatprep.subr.mxu0 0.0
    %78 = vmatpush1.msra.mxu0 %v48
    %79 = vmatprep.subr.mxu0 0.0
    %80 = vmatpush1.msra.mxu0 %v49
    %81 = vmatprep.subr.mxu0 0.0
    %82 = vmatpush1.msra.mxu0 %v50
    %83 = vmatprep.subr.mxu0 0.0
    %84 = vmatpush1.msra.mxu0 %v51
    %85 = vmatprep.subr.mxu0 0.0
    %86 = vmatpush1.msra.mxu0 %v52
    %87 = vmatprep.subr.mxu0 0.0
    %88 = vmatpush1.msra.mxu0 %v53
    %89 = vmatprep.subr.mxu0 0.0
    %90 = vmatpush1.msra.mxu0 %v54
    %91 = vmatprep.subr.mxu0 0.0
    %92 = vmatpush1.msra.mxu0 %v55
    %93 = vmatprep.subr.mxu0 0.0
    %94 = vmatpush1.msra.mxu0 %v56
    %95 = vmatprep.subr.mxu0 0.0
    %96 = vmatpush1.msra.mxu0 %v57
    %97 = vmatprep.subr.mxu0 0.0
    %98 = vmatpush1.msra.mxu0 0.0
    %99 = vmatprep.subr.mxu0 0.0
    %100 = vmatpush1.msra.mxu0 0.0
    %101 = vmatprep.subr.mxu0 0.0
    %102 = vmatpush1.msra.mxu0 0.0
    %103 = vmatprep.subr.mxu0 0.0
    %104 = vmatpush1.msra.mxu0 0.0
    %105 = vmatprep.subr.mxu0 0.0
    %106 = vmatpush1.msra.mxu0 0.0
    %107 = vmatprep.subr.mxu0 0.0
    %108 = vmatpush1.msra.mxu0 0.0
    %109 = vmatprep.subr.mxu0 0.0
    %110 = vmatpush1.msra.mxu0 0.0
    %111 = vmatprep.subr.mxu0 0.0
    %112 = vmatpush1.msra.mxu0 0.0
    %113 = vmatprep.subr.mxu0 0.0
    %114 = vmatpush1.msra.mxu0 0.0
    %115 = vmatprep.subr.mxu0 0.0
    %116 = vmatpush1.msra.mxu0 0.0
    %117 = vmatprep.subr.mxu0 0.0
    %118 = vmatpush1.msra.mxu0 0.0
    %119 = vmatprep.subr.mxu0 0.0
    %120 = vmatpush1.msra.mxu0 0.0
    %121 = vmatprep.subr.mxu0 0.0
    %122 = vmatpush1.msra.mxu0 0.0
    %123 = vmatprep.subr.mxu0 0.0
    %124 = vmatpush1.msra.mxu0 0.0
    %125 = vmatprep.subr.mxu0 0.0
    %126 = vmatpush1.msra.mxu0 0.0
    %127 = vmatprep.subr.mxu0 0.0
    %128 = vmatpush1.msra.mxu0 0.0
    %129 = vmatprep.mubr.f32.mxu0 0.0
    %130 = vmatmul.mubr.f32.gmra.mrb[0].mxu0 %v41
    %v131 = vpop.f32.mrb[0].mxu0
    %v132 = vadd.f32 %v63, %v131
    %v133 = vpop.f32.mrb[0].mxu0
    %134 = vdwg.mxu0
    %135 = vst [vmem:[#allocation7] sm:$0xff] %v132
    // Predicated region
    $region22: #{tpu_custom_call.1} parent=1 // pred_check
      _
    $region23: #{tpu_custom_call.1} parent=1 // pred_check_branch
      %137 = sbr.rel (0) target = $region25
    $region24: #{tpu_custom_call.1} parent=1 // pred_region
      %s139 = ssub.s32 128, 128
      %140 = vsyncadd [#allocation4], %s139
      %s142 = sshll.u32 [#allocation7], 4
      %s143 = int_to_ptr.vmem [resolvable:$true] %s142
      %145 = dma.vmem_to_hbm [thread:$0]  %s143, 128, %s3, [#allocation4]
    $region25: #{tpu_custom_call.1} parent=1 // pred_fallthru
      _
    // Predicated region
    $region26: #{tpu_custom_call.1} parent=1 // pred_check
      _
    $region27: #{tpu_custom_call.1} parent=1 // pred_check_branch
      %147 = sbr.rel (0) target = $region29
    $region28: #{tpu_custom_call.1} parent=1 // pred_region
      %148 = dma.done [#allocation4], 128
    $region29: #{tpu_custom_call.1} parent=1 // pred_fallthru
      _
    %149 = vsyncpa [#allocation3], 1
    %150 = vsyncpa [#allocation6], 1
    %151 = vsyncpa [#allocation4], 1

</llo_original>
